<compile_context>
chip_gen: v5e
topology: v5e:2x2
jax: 0.10.0
libtpu: 0.0.40
codegen_flags: <defaults>
</compile_context>

<pallas_src>
import jax
import jax.numpy as jnp
from jax.experimental import pallas as pl
from jax.experimental.pallas import tpu as pltpu


def _round_up(x: int, m: int) -> int:
    return ((x + m - 1) // m) * m


def _tpu_tuning():
    """Return (per_buffer_tile_bytes, vmem_limit_bytes_or_None, num_cores)."""
    kind = ""
    try:
        kind = jax.devices()[0].device_kind.lower()
    except Exception:
        pass
    if "v7" in kind:
        # 2 TCs/chip, ~3.2 TB/s HBM, 64 MiB physical VMEM (32 MiB scoped default).
        return 8 * 1024 * 1024, 48 << 20, 2
    if "v5 lite" in kind or "v5e" in kind or "v5lite" in kind:
        # 16 MiB scoped default; 4 x 3 MiB buffers leave headroom, and at
        # ~0.8 TB/s bigger tiles buy little — keep defaults.
        return 3 * 1024 * 1024, None, 1
    # v6e-class default (also a safe fallback for unknown device kinds:
    # 48 MiB is under physical VMEM on every generation).
    return 6 * 1024 * 1024, 48 << 20, 1


def _chomp_copy_kernel(x_ref, o_ref):
    # Pure identity copy; the trim lives entirely in the grid / out_shape.
    # Keep it a pure copy (no casts / extra VPU work) — the binding resource
    # is HBM DMA bandwidth on every TPU generation.
    o_ref[...] = x_ref[...]


def chomp1d(x: jax.Array, chomp_size: int) -> jax.Array:
    """Pallas equivalent of Chomp1d.forward: x[:, :, :-chomp_size]."""
    # torch's x[:, :, :-0] would return an empty tensor; the TCN module only
    # ever uses chomp_size > 0, so we require it (documented divergence).
    assert chomp_size > 0, "chomp_size must be positive"
    n, c, l = x.shape
    l_out = l - chomp_size
    assert l_out > 0, "chomp_size must be smaller than the sequence length"

    # Flatten (N, C) -> rows; contiguous in NCL layout, so this reshape is free.
    rows = n * c
    x2 = x.reshape(rows, l)

    itemsize = jnp.dtype(x.dtype).itemsize
    sub_pack = max(8, 32 // itemsize)  # sublane packing: 8 f32 / 16 bf16 / 32 int8

    tile_bytes, vmem_limit, num_cores = _tpu_tuning()

    # --- Lane tile first: as wide as the per-tile budget allows at the minimal
    # sublane-packed row height, then rebalanced so the final lane tile is not
    # a mostly-masked 128-wide sliver.
    lane_budget = max(128, (tile_bytes // (sub_pack * itemsize)) // 128 * 128)
    l_pad = _round_up(l_out, 128)
    if l_pad <= lane_budget:
        tl = l_pad  # whole (padded) row width in one lane tile
    else:
        n_lane = pl.cdiv(l_pad, lane_budget)
        tl = min(lane_budget, _round_up(pl.cdiv(l_out, n_lane), 128))

    # --- Row tile from the remaining per-tile budget.
    tr = max(sub_pack, (tile_bytes // (tl * itemsize)) // sub_pack * sub_pack)
    tr = min(tr, _round_up(rows, sub_pack))

    # --- On multi-core chips (v7x), make sure there is enough grid parallelism
    # for both TensorCores; shrink the row tile (then the lane tile) until the
    # grid has >= 2 blocks per core, when the input is large enough to split.
    if num_cores > 1:
        min_blocks = 2 * num_cores
        while (pl.cdiv(rows, tr) * pl.cdiv(l_out, tl)) < min_blocks and tr > sub_pack:
            tr = max(sub_pack, (tr // 2) // sub_pack * sub_pack)
        while (pl.cdiv(rows, tr) * pl.cdiv(l_out, tl)) < min_blocks and tl > 128:
            tl = max(128, (tl // 2) // 128 * 128)

    grid = (pl.cdiv(rows, tr), pl.cdiv(l_out, tl))

    cp_kwargs = dict(dimension_semantics=("parallel", "parallel"))
    if vmem_limit is not None:
        cp_kwargs["vmem_limit_bytes"] = vmem_limit

    out2 = pl.pallas_call(
        _chomp_copy_kernel,
        out_shape=jax.ShapeDtypeStruct((rows, l_out), x.dtype),
        grid_spec=pltpu.PrefetchScalarGridSpec(
            num_scalar_prefetch=0,
            grid=grid,
            # Identical block shape + index_map for input and output: the
            # slice starts at lane 0, so output block (i, j) is exactly input
            # block (i, j); lanes >= l_out are masked on writeback and the
            # chomped tail is only touched (read-only) by the last lane tile.
            in_specs=[pl.BlockSpec((tr, tl), lambda i, j: (i, j))],
            out_specs=pl.BlockSpec((tr, tl), lambda i, j: (i, j)),
        ),
        compiler_params=pltpu.CompilerParams(**cp_kwargs),
        cost_estimate=pl.CostEstimate(
            flops=0,
            transcendentals=0,
            bytes_accessed=2 * rows * l_out * itemsize,
        ),
    )(x2)

    return out2.reshape(n, c, l_out)


if __name__ == "__main__":
    key = jax.random.PRNGKey(0)
    batch, channels, length = 2, 4, 16
    chomp_size = 3

    x = jax.random.normal(key, (batch, channels, length), dtype=jnp.float32)

    out = chomp1d(x, chomp_size)
    out = jax.block_until_ready(out)

    # Reference check against plain slicing (same semantics as the torch module).
    ref = x[:, :, :-chomp_size]
    assert out.shape == (batch, channels, length - chomp_size), out.shape
    assert out.dtype == x.dtype
    assert jnp.array_equal(out, ref)

    print("KERNEL_OK")
</pallas_src>

<mosaic_0001>
module attributes {stable_mosaic.version = 11 : i64} {
  func.func @_chomp_copy_kernel(%arg0: i32, %arg1: i32, %arg2: memref<8x128xf32, #tpu.memory_space<vmem>>, %arg3: memref<8x128xf32, #tpu.memory_space<vmem>>) attributes {dimension_semantics = [#tpu.dimension_semantics<parallel>, #tpu.dimension_semantics<parallel>], iteration_bounds = array<i64: 1, 1>, scalar_prefetch = 0 : i64, scratch_operands = 0 : i64, tpu.core_type = #tpu.core_type<tc>, window_params = [{transform_indices = @transform_0, window_bounds = array<i64: 8, 128>}, {transform_indices = @transform_1, window_bounds = array<i64: 8, 128>}]} {
    %c0 = arith.constant 0 : index
    %c0_0 = arith.constant 0 : index
    %0 = vector.load %arg2[%c0, %c0_0] : memref<8x128xf32, #tpu.memory_space<vmem>>, vector<8x128xf32>
    %c0_1 = arith.constant 0 : index
    %c0_2 = arith.constant 0 : index
    %1 = vector.load %arg3[%c0_1, %c0_2] : memref<8x128xf32, #tpu.memory_space<vmem>>, vector<8x128xf32>
    tpu.vector_store %arg3[%c0_1, %c0_2], %0 {strides = array<i32>} : memref<8x128xf32, #tpu.memory_space<vmem>>, vector<8x128xf32>,
    return
  }
  func.func @transform_0(%arg0: i32, %arg1: i32) -> (i32, i32) {
    %c0_i32 = arith.constant 0 : i32
    return %arg0, %arg1 : i32, i32
  }
  func.func @transform_1(%arg0: i32, %arg1: i32) -> (i32, i32) {
    %c0_i32 = arith.constant 0 : i32
    return %arg0, %arg1 : i32, i32
  }
}

</mosaic_0001>

<llo_original>
// kernel: tpu_custom_call.1
$region0: #{tpu_custom_call.1}
  #allocation0 [shape = 'u32[]', space=smem, size = 0x4, offset = 0x4, fixed_abs, tag = 'smem constant byte address 0x4 - core index']
  #allocation1 [shape = 'u32[72,128]{1,0:T(1,128)}', space=vmem, size = 0x9000, scoped, tag = 'internal scratch']
  %s0 = inlined_call_operand.hbm [shape: f32[8,16], index: 0, kind: input, shape index: {}]
  %s1 = inlined_call_operand.hbm [shape: f32[8,13], index: 1, kind: output, shape index: {}]
  %s2 = sld [smem:[#allocation0]]
  $region18: #{tpu_custom_call.1} parent=0
    _
  %s4 = ssub.s32 1, %s2
  %s5 = scalar_select 0, %s4, %s2
  $region1: #{tpu_custom_call.1} parent=0
    #allocation2 [shape = 'u8[4096]{0}', space=vmem, size = 0x1000, scoped, tag = 'input window, operand 0, single buffered']
    #allocation3 [shape = 's32[1]{0}', space=sflag, size = 0x4, scoped, tag = 'scoped memory for tpu_custom_call.1']
    #allocation4 [shape = 's32[1]{0}', space=sflag, size = 0x4, scoped, tag = 'scoped memory for tpu_custom_call.1']
    #allocation5 [shape = 'u8[4096]{0}', space=vmem, size = 0x1000, scoped, tag = 'output window, operand 0, single buffered']
    %6 = vsyncpa [#allocation3], 0
    %7 = vsyncpa [#allocation4], 0
    // Predicated region
    $region2: #{tpu_custom_call.1} parent=1 // pred_check
      _
    $region3: #{tpu_custom_call.1} parent=1 // pred_check_branch
      %9 = sbr.rel (0) target = $region5
    $region4: #{tpu_custom_call.1} parent=1 // pred_region
      %11 = vsyncadd [#allocation3], 0
      %s13 = sshll.u32 %s0, 4
      %s14 = int_to_ptr.hbm [resolvable:$true] %s13
      %s15 = sshll.u32 [#allocation2], 4
      %s16 = int_to_ptr.vmem [resolvable:$true] %s15
      %18 = dma.hbm_to_vmem [thread:$0]  %s14, 128, %s16, [#allocation3]
    $region5: #{tpu_custom_call.1} parent=1 // pred_fallthru
      _
    // Predicated region
    $region6: #{tpu_custom_call.1} parent=1 // pred_check
      _
    $region7: #{tpu_custom_call.1} parent=1 // pred_check_branch
      %20 = sbr.rel (0) target = $region9
    $region8: #{tpu_custom_call.1} parent=1 // pred_region
      %22 = dma.done [#allocation3], 128
    $region9: #{tpu_custom_call.1} parent=1 // pred_fallthru
      _
    %v23 = vld [vmem:[#allocation2] sm:$0xff]
    %24 = vst [vmem:[#allocation5] sm:$0xff] %v23
    // Predicated region
    $region10: #{tpu_custom_call.1} parent=1 // pred_check
      _
    $region11: #{tpu_custom_call.1} parent=1 // pred_check_branch
      %26 = sbr.rel (0) target = $region13
    $region12: #{tpu_custom_call.1} parent=1 // pred_region
      %28 = vsyncadd [#allocation4], 0
      %s30 = sshll.u32 [#allocation5], 4
      %s31 = int_to_ptr.vmem [resolvable:$true] %s30
      %s32 = sshll.u32 %s1, 4
      %s33 = int_to_ptr.hbm [resolvable:$true] %s32
      %35 = dma.vmem_to_hbm [thread:$0]  %s31, 128, %s33, [#allocation4]
    $region13: #{tpu_custom_call.1} parent=1 // pred_fallthru
      _
    // Predicated region
    $region14: #{tpu_custom_call.1} parent=1 // pred_check
      _
    $region15: #{tpu_custom_call.1} parent=1 // pred_check_branch
      %37 = sbr.rel (0) target = $region17
    $region16: #{tpu_custom_call.1} parent=1 // pred_region
      %39 = dma.done [#allocation4], 128
    $region17: #{tpu_custom_call.1} parent=1 // pred_fallthru
      _
    %40 = vsyncpa [#allocation3], 1
    %41 = vsyncpa [#allocation4], 1

</llo_original>
